<compile_context>
chip_gen: v5e
topology: v5e:2x2
jax: 0.10.0
libtpu: 0.0.40
codegen_flags: <defaults>
</compile_context>

<pallas_src>
import functools
import math

import jax
import jax.numpy as jnp
import numpy as np
from jax import lax
from jax.experimental import pallas as pl
from jax.experimental.pallas import tpu as pltpu


def _mha_kernel(xq_ref, xk_ref, xv_ref,
                wq_ref, wk_ref, wv_ref,
                bq_ref, bk_ref, bv_ref,
                *rest, num_heads, scale, has_mask):
    if has_mask:
        mask_ref, out_ref = rest
    else:
        (out_ref,) = rest

    xq = xq_ref[0]          # (tq, hidden)
    xk = xk_ref[0]          # (S, hidden)
    xv = xv_ref[0]          # (S, hidden)

    # Fused (all heads at once) linear projections -> full MXU N dimension.
    q = jnp.dot(xq, wq_ref[...], preferred_element_type=jnp.float32) + bq_ref[...]
    k = jnp.dot(xk, wk_ref[...], preferred_element_type=jnp.float32) + bk_ref[...]
    v = jnp.dot(xv, wv_ref[...], preferred_element_type=jnp.float32) + bv_ref[...]

    # Fold the 1/sqrt(head_dim) scale into Q (cheaper than scaling (S,S) scores).
    q = q * scale

    hidden = q.shape[-1]
    head_dim = hidden // num_heads

    if has_mask:
        mask = mask_ref[0]  # (tq, S)

    ctx_heads = []
    for h in range(num_heads):          # static unrolled loop over heads
        sl = slice(h * head_dim, (h + 1) * head_dim)
        qh, kh, vh = q[:, sl], k[:, sl], v[:, sl]
        # scores = Qh Kh^T (contract last dims; no explicit transpose)
        scores = lax.dot_general(qh, kh, (((1,), (1,)), ((), ())),
                                 preferred_element_type=jnp.float32)
        if has_mask:
            scores = scores + mask
        # NOTE: the original module multiplies RAW scores (not softmax) with V.
        ctx_heads.append(jnp.dot(scores, vh,
                                 preferred_element_type=jnp.float32))

    # Head-concat along the lane dim == permute(0,2,1,3).view(B,S,hidden);
    # single lane-dense store of the (tq, hidden) slab.
    out_ref[0] = jnp.concatenate(ctx_heads, axis=-1).astype(out_ref.dtype)


def multi_head_attention(query, key, value, params, num_heads,
                         attention_mask=None, *, block_q=None):
    """Pallas implementation of MultiHeadAttentionLayer.forward.

    query/key/value: (B, S, hidden) float32
    params: dict with 'wq','wk','wv' of shape (hidden, hidden) (y = x @ W + b)
            and 'bq','bk','bv' of shape (hidden,)
    attention_mask: optional additive mask, shape (S,S), (1,S,S) or (B,S,S)
    Returns a 1-tuple (context,) with context of shape (B, S, hidden).
    """
    B, S, hidden = query.shape
    assert hidden % num_heads == 0
    head_dim = hidden // num_heads

    # Query-sequence tiling (keeps VMEM bounded at real sizes; trivially the
    # whole sequence at toy sizes).
    if block_q is None:
        block_q = S if S <= 512 else 512
    if S % block_q != 0:
        block_q = S
    n_q = S // block_q

    wq, wk, wv = params["wq"], params["wk"], params["wv"]
    bq = params["bq"].reshape(1, hidden)
    bk = params["bk"].reshape(1, hidden)
    bv = params["bv"].reshape(1, hidden)

    xq_spec = pl.BlockSpec((1, block_q, hidden), lambda b, qi: (b, qi, 0))
    xkv_spec = pl.BlockSpec((1, S, hidden), lambda b, qi: (b, 0, 0))
    w_spec = pl.BlockSpec((hidden, hidden), lambda b, qi: (0, 0))
    b_spec = pl.BlockSpec((1, hidden), lambda b, qi: (0, 0))
    o_spec = pl.BlockSpec((1, block_q, hidden), lambda b, qi: (b, qi, 0))

    in_specs = [xq_spec, xkv_spec, xkv_spec,
                w_spec, w_spec, w_spec,
                b_spec, b_spec, b_spec]
    args = [query, key, value, wq, wk, wv, bq, bk, bv]

    has_mask = attention_mask is not None
    if has_mask:
        m = attention_mask.astype(jnp.float32)
        if m.ndim == 2:
            m = m[None]
        if m.shape[0] == 1:
            # Batch-independent mask: single block, held resident; no broadcast copy.
            m_spec = pl.BlockSpec((1, block_q, S), lambda b, qi: (0, qi, 0))
        else:
            m_spec = pl.BlockSpec((1, block_q, S), lambda b, qi: (b, qi, 0))
        in_specs.append(m_spec)
        args.append(m)

    kernel = functools.partial(
        _mha_kernel,
        num_heads=num_heads,
        scale=1.0 / math.sqrt(head_dim),
        has_mask=has_mask,
    )

    context = pl.pallas_call(
        kernel,
        out_shape=jax.ShapeDtypeStruct((B, S, hidden), query.dtype),
        grid_spec=pltpu.PrefetchScalarGridSpec(
            num_scalar_prefetch=0,
            grid=(B, n_q),
            in_specs=in_specs,
            out_specs=o_spec,
        ),
        compiler_params=pltpu.CompilerParams(
            dimension_semantics=("parallel", "parallel")),
    )(*args)

    return (context,)


def _reference_forward(query, key, value, params, num_heads, attention_mask=None):
    """Plain-JAX replica of the (buggy) PyTorch forward, for verification."""
    B, S, hidden = query.shape
    D = hidden // num_heads

    def proj(x, w, b):
        return x @ w + b

    def to_heads(x):  # (B,S,hidden) -> (B,H,S,D)
        return x.reshape(B, S, num_heads, D).transpose(0, 2, 1, 3)

    q = to_heads(proj(query, params["wq"], params["bq"]))
    k = to_heads(proj(key, params["wk"], params["bk"]))
    v = to_heads(proj(value, params["wv"], params["bv"]))

    scores = jnp.einsum("bhqd,bhkd->bhqk", q, k) / math.sqrt(D)
    if attention_mask is not None:
        am = attention_mask
        if am.ndim == 2:
            am = am[None]
        scores = scores + am[:, None, :, :]
    # softmax computed in torch code but not used for the output
    ctx = jnp.einsum("bhqk,bhkd->bhqd", scores, v)
    ctx = ctx.transpose(0, 2, 1, 3).reshape(B, S, hidden)
    return (ctx,)


if __name__ == "__main__":
    B, S, hidden, num_heads = 2, 8, 32, 4

    key0 = jax.random.PRNGKey(0)
    ks = jax.random.split(key0, 10)
    bound = 1.0 / math.sqrt(hidden)  # mimic nn.Linear default init range

    params = {
        "wq": jax.random.uniform(ks[0], (hidden, hidden), jnp.float32, -bound, bound),
        "wk": jax.random.uniform(ks[1], (hidden, hidden), jnp.float32, -bound, bound),
        "wv": jax.random.uniform(ks[2], (hidden, hidden), jnp.float32, -bound, bound),
        "bq": jax.random.uniform(ks[3], (hidden,), jnp.float32, -bound, bound),
        "bk": jax.random.uniform(ks[4], (hidden,), jnp.float32, -bound, bound),
        "bv": jax.random.uniform(ks[5], (hidden,), jnp.float32, -bound, bound),
    }

    query = jax.random.normal(ks[6], (B, S, hidden), jnp.float32)
    keyx = jax.random.normal(ks[7], (B, S, hidden), jnp.float32)
    value = jax.random.normal(ks[8], (B, S, hidden), jnp.float32)
    # additive attention mask (0 = keep, large negative = mask)
    attn_mask = jnp.where(
        jax.random.bernoulli(ks[9], 0.9, (B, S, S)), 0.0, -1e4
    ).astype(jnp.float32)

    # Masked path
    (ctx,) = multi_head_attention(query, keyx, value, params, num_heads,
                                  attention_mask=attn_mask)
    jax.block_until_ready(ctx)
    (ctx_ref,) = _reference_forward(query, keyx, value, params, num_heads,
                                    attention_mask=attn_mask)
    np.testing.assert_allclose(np.asarray(ctx), np.asarray(ctx_ref),
                               rtol=5e-3, atol=1e-2)

    # No-mask path (no zero-mask materialization)
    (ctx_nm,) = multi_head_attention(query, keyx, value, params, num_heads,
                                     attention_mask=None)
    jax.block_until_ready(ctx_nm)
    (ctx_nm_ref,) = _reference_forward(query, keyx, value, params, num_heads,
                                       attention_mask=None)
    np.testing.assert_allclose(np.asarray(ctx_nm), np.asarray(ctx_nm_ref),
                               rtol=5e-3, atol=1e-3)

    print("KERNEL_OK")
</pallas_src>

<mosaic_0001>
module attributes {stable_mosaic.version = 11 : i64} {
  func.func @_mha_kernel(%arg0: i32, %arg1: i32, %arg2: memref<1x8x32xf32, #tpu.memory_space<vmem>>, %arg3: memref<1x8x32xf32, #tpu.memory_space<vmem>>, %arg4: memref<1x8x32xf32, #tpu.memory_space<vmem>>, %arg5: memref<32x32xf32, #tpu.memory_space<vmem>>, %arg6: memref<32x32xf32, #tpu.memory_space<vmem>>, %arg7: memref<32x32xf32, #tpu.memory_space<vmem>>, %arg8: memref<1x32xf32, #tpu.memory_space<vmem>>, %arg9: memref<1x32xf32, #tpu.memory_space<vmem>>, %arg10: memref<1x32xf32, #tpu.memory_space<vmem>>, %arg11: memref<1x8x8xf32, #tpu.memory_space<vmem>>, %arg12: memref<1x8x32xf32, #tpu.memory_space<vmem>>) attributes {dimension_semantics = [#tpu.dimension_semantics<parallel>, #tpu.dimension_semantics<parallel>], iteration_bounds = array<i64: 2, 1>, scalar_prefetch = 0 : i64, scratch_operands = 0 : i64, tpu.core_type = #tpu.core_type<tc>, window_params = [{transform_indices = @transform_0, window_bounds = array<i64: 1, 8, 32>}, {transform_indices = @transform_1, window_bounds = array<i64: 1, 8, 32>}, {transform_indices = @transform_2, window_bounds = array<i64: 1, 8, 32>}, {pipeline_mode = #tpu.pipeline_mode<synchronous>, transform_indices = @transform_3, window_bounds = array<i64: 32, 32>}, {pipeline_mode = #tpu.pipeline_mode<synchronous>, transform_indices = @transform_4, window_bounds = array<i64: 32, 32>}, {pipeline_mode = #tpu.pipeline_mode<synchronous>, transform_indices = @transform_5, window_bounds = array<i64: 32, 32>}, {pipeline_mode = #tpu.pipeline_mode<synchronous>, transform_indices = @transform_6, window_bounds = array<i64: 1, 32>}, {pipeline_mode = #tpu.pipeline_mode<synchronous>, transform_indices = @transform_7, window_bounds = array<i64: 1, 32>}, {pipeline_mode = #tpu.pipeline_mode<synchronous>, transform_indices = @transform_8, window_bounds = array<i64: 1, 32>}, {transform_indices = @transform_9, window_bounds = array<i64: 1, 8, 8>}, {transform_indices = @transform_10, window_bounds = array<i64: 1, 8, 32>}]} {
    %c0 = arith.constant 0 : index
    %c0_0 = arith.constant 0 : index
    %c0_1 = arith.constant 0 : index
    %0 = vector.load %arg2[%c0, %c0_0, %c0_1] : memref<1x8x32xf32, #tpu.memory_space<vmem>>, vector<1x8x32xf32>
    %1 = vector.shape_cast %0 : vector<1x8x32xf32> to vector<8x32xf32>
    %c0_2 = arith.constant 0 : index
    %c0_3 = arith.constant 0 : index
    %c0_4 = arith.constant 0 : index
    %2 = vector.load %arg3[%c0_2, %c0_3, %c0_4] : memref<1x8x32xf32, #tpu.memory_space<vmem>>, vector<1x8x32xf32>
    %3 = vector.shape_cast %2 : vector<1x8x32xf32> to vector<8x32xf32>
    %c0_5 = arith.constant 0 : index
    %c0_6 = arith.constant 0 : index
    %c0_7 = arith.constant 0 : index
    %4 = vector.load %arg4[%c0_5, %c0_6, %c0_7] : memref<1x8x32xf32, #tpu.memory_space<vmem>>, vector<1x8x32xf32>
    %5 = vector.shape_cast %4 : vector<1x8x32xf32> to vector<8x32xf32>
    %c0_8 = arith.constant 0 : index
    %c0_9 = arith.constant 0 : index
    %6 = vector.load %arg5[%c0_8, %c0_9] : memref<32x32xf32, #tpu.memory_space<vmem>>, vector<32x32xf32>
    %cst = arith.constant dense<0.000000e+00> : vector<8x32xf32>
    %7 = tpu.matmul %1, %6, %cst {dimension_numbers = #tpu.dot_dimension_numbers<[1], [0], [0], [1], [0, 0, 1, 1], [], []>} : vector<8x32xf32>, vector<32x32xf32>, vector<8x32xf32> -> vector<8x32xf32>
    %c0_10 = arith.constant 0 : index
    %c0_11 = arith.constant 0 : index
    %8 = vector.load %arg8[%c0_10, %c0_11] : memref<1x32xf32, #tpu.memory_space<vmem>>, vector<1x32xf32>
    %9 = vector.broadcast %8 : vector<1x32xf32> to vector<8x32xf32>
    %10 = arith.addf %7, %9 : vector<8x32xf32>
    %c0_12 = arith.constant 0 : index
    %c0_13 = arith.constant 0 : index
    %11 = vector.load %arg6[%c0_12, %c0_13] : memref<32x32xf32, #tpu.memory_space<vmem>>, vector<32x32xf32>
    %cst_14 = arith.constant dense<0.000000e+00> : vector<8x32xf32>
    %12 = tpu.matmul %3, %11, %cst_14 {dimension_numbers = #tpu.dot_dimension_numbers<[1], [0], [0], [1], [0, 0, 1, 1], [], []>} : vector<8x32xf32>, vector<32x32xf32>, vector<8x32xf32> -> vector<8x32xf32>
    %c0_15 = arith.constant 0 : index
    %c0_16 = arith.constant 0 : index
    %13 = vector.load %arg9[%c0_15, %c0_16] : memref<1x32xf32, #tpu.memory_space<vmem>>, vector<1x32xf32>
    %14 = vector.broadcast %13 : vector<1x32xf32> to vector<8x32xf32>
    %15 = arith.addf %12, %14 : vector<8x32xf32>
    %c0_17 = arith.constant 0 : index
    %c0_18 = arith.constant 0 : index
    %16 = vector.load %arg7[%c0_17, %c0_18] : memref<32x32xf32, #tpu.memory_space<vmem>>, vector<32x32xf32>
    %cst_19 = arith.constant dense<0.000000e+00> : vector<8x32xf32>
    %17 = tpu.matmul %5, %16, %cst_19 {dimension_numbers = #tpu.dot_dimension_numbers<[1], [0], [0], [1], [0, 0, 1, 1], [], []>} : vector<8x32xf32>, vector<32x32xf32>, vector<8x32xf32> -> vector<8x32xf32>
    %c0_20 = arith.constant 0 : index
    %c0_21 = arith.constant 0 : index
    %18 = vector.load %arg10[%c0_20, %c0_21] : memref<1x32xf32, #tpu.memory_space<vmem>>, vector<1x32xf32>
    %19 = vector.broadcast %18 : vector<1x32xf32> to vector<8x32xf32>
    %20 = arith.addf %17, %19 : vector<8x32xf32>
    %cst_22 = arith.constant 0.353553385 : f32
    %21 = vector.broadcast %cst_22 : f32 to vector<8x32xf32>
    %22 = arith.mulf %10, %21 : vector<8x32xf32>
    %c0_23 = arith.constant 0 : index
    %c0_24 = arith.constant 0 : index
    %c0_25 = arith.constant 0 : index
    %23 = vector.load %arg11[%c0_23, %c0_24, %c0_25] : memref<1x8x8xf32, #tpu.memory_space<vmem>>, vector<1x8x8xf32>
    %24 = vector.shape_cast %23 : vector<1x8x8xf32> to vector<8x8xf32>
    %25 = vector.extract_strided_slice %22 {offsets = [0, 0], sizes = [8, 8], strides = [1, 1]} : vector<8x32xf32> to vector<8x8xf32>
    %26 = vector.extract_strided_slice %15 {offsets = [0, 0], sizes = [8, 8], strides = [1, 1]} : vector<8x32xf32> to vector<8x8xf32>
    %27 = vector.extract_strided_slice %20 {offsets = [0, 0], sizes = [8, 8], strides = [1, 1]} : vector<8x32xf32> to vector<8x8xf32>
    %cst_26 = arith.constant dense<0.000000e+00> : vector<8x8xf32>
    %28 = tpu.matmul %25, %26, %cst_26 {dimension_numbers = #tpu.dot_dimension_numbers<[1], [1], [0], [0], [0, 0, 1, 0], [], []>} : vector<8x8xf32>, vector<8x8xf32>, vector<8x8xf32> -> vector<8x8xf32>
    %29 = arith.addf %28, %24 : vector<8x8xf32>
    %cst_27 = arith.constant dense<0.000000e+00> : vector<8x8xf32>
    %30 = tpu.matmul %29, %27, %cst_27 {dimension_numbers = #tpu.dot_dimension_numbers<[1], [0], [0], [1], [0, 0, 1, 1], [], []>} : vector<8x8xf32>, vector<8x8xf32>, vector<8x8xf32> -> vector<8x8xf32>
    %31 = vector.extract_strided_slice %22 {offsets = [0, 8], sizes = [8, 8], strides = [1, 1]} : vector<8x32xf32> to vector<8x8xf32>
    %32 = vector.extract_strided_slice %15 {offsets = [0, 8], sizes = [8, 8], strides = [1, 1]} : vector<8x32xf32> to vector<8x8xf32>
    %33 = vector.extract_strided_slice %20 {offsets = [0, 8], sizes = [8, 8], strides = [1, 1]} : vector<8x32xf32> to vector<8x8xf32>
    %cst_28 = arith.constant dense<0.000000e+00> : vector<8x8xf32>
    %34 = tpu.matmul %31, %32, %cst_28 {dimension_numbers = #tpu.dot_dimension_numbers<[1], [1], [0], [0], [0, 0, 1, 0], [], []>} : vector<8x8xf32>, vector<8x8xf32>, vector<8x8xf32> -> vector<8x8xf32>
    %35 = arith.addf %34, %24 : vector<8x8xf32>
    %cst_29 = arith.constant dense<0.000000e+00> : vector<8x8xf32>
    %36 = tpu.matmul %35, %33, %cst_29 {dimension_numbers = #tpu.dot_dimension_numbers<[1], [0], [0], [1], [0, 0, 1, 1], [], []>} : vector<8x8xf32>, vector<8x8xf32>, vector<8x8xf32> -> vector<8x8xf32>
    %37 = vector.extract_strided_slice %22 {offsets = [0, 16], sizes = [8, 8], strides = [1, 1]} : vector<8x32xf32> to vector<8x8xf32>
    %38 = vector.extract_strided_slice %15 {offsets = [0, 16], sizes = [8, 8], strides = [1, 1]} : vector<8x32xf32> to vector<8x8xf32>
    %39 = vector.extract_strided_slice %20 {offsets = [0, 16], sizes = [8, 8], strides = [1, 1]} : vector<8x32xf32> to vector<8x8xf32>
    %cst_30 = arith.constant dense<0.000000e+00> : vector<8x8xf32>
    %40 = tpu.matmul %37, %38, %cst_30 {dimension_numbers = #tpu.dot_dimension_numbers<[1], [1], [0], [0], [0, 0, 1, 0], [], []>} : vector<8x8xf32>, vector<8x8xf32>, vector<8x8xf32> -> vector<8x8xf32>
    %41 = arith.addf %40, %24 : vector<8x8xf32>
    %cst_31 = arith.constant dense<0.000000e+00> : vector<8x8xf32>
    %42 = tpu.matmul %41, %39, %cst_31 {dimension_numbers = #tpu.dot_dimension_numbers<[1], [0], [0], [1], [0, 0, 1, 1], [], []>} : vector<8x8xf32>, vector<8x8xf32>, vector<8x8xf32> -> vector<8x8xf32>
    %43 = vector.extract_strided_slice %22 {offsets = [0, 24], sizes = [8, 8], strides = [1, 1]} : vector<8x32xf32> to vector<8x8xf32>
    %44 = vector.extract_strided_slice %15 {offsets = [0, 24], sizes = [8, 8], strides = [1, 1]} : vector<8x32xf32> to vector<8x8xf32>
    %45 = vector.extract_strided_slice %20 {offsets = [0, 24], sizes = [8, 8], strides = [1, 1]} : vector<8x32xf32> to vector<8x8xf32>
    %cst_32 = arith.constant dense<0.000000e+00> : vector<8x8xf32>
    %46 = tpu.matmul %43, %44, %cst_32 {dimension_numbers = #tpu.dot_dimension_numbers<[1], [1], [0], [0], [0, 0, 1, 0], [], []>} : vector<8x8xf32>, vector<8x8xf32>, vector<8x8xf32> -> vector<8x8xf32>
    %47 = arith.addf %46, %24 : vector<8x8xf32>
    %cst_33 = arith.constant dense<0.000000e+00> : vector<8x8xf32>
    %48 = tpu.matmul %47, %45, %cst_33 {dimension_numbers = #tpu.dot_dimension_numbers<[1], [0], [0], [1], [0, 0, 1, 1], [], []>} : vector<8x8xf32>, vector<8x8xf32>, vector<8x8xf32> -> vector<8x8xf32>
    %49 = tpu.concatenate %30, %36, %42, %48 in 1 : vector<8x8xf32>, vector<8x8xf32>, vector<8x8xf32>, vector<8x8xf32> -> vector<8x32xf32>
    %c0_34 = arith.constant 0 : index
    %c0_35 = arith.constant 0 : index
    %c0_36 = arith.constant 0 : index
    %50 = vector.load %arg12[%c0_34, %c0_35, %c0_36] : memref<1x8x32xf32, #tpu.memory_space<vmem>>, vector<1x8x32xf32>
    %51 = vector.shape_cast %50 : vector<1x8x32xf32> to vector<8x32xf32>
    %52 = vector.shape_cast %49 : vector<8x32xf32> to vector<1x8x32xf32>
    tpu.vector_store %arg12[%c0_34, %c0_35, %c0_36], %52 {strides = array<i32>} : memref<1x8x32xf32, #tpu.memory_space<vmem>>, vector<1x8x32xf32>,
    return
  }
  func.func @transform_0(%arg0: i32, %arg1: i32) -> (i32, i32, i32) {
    %c0_i32 = arith.constant 0 : i32
    %c0_i32_0 = arith.constant 0 : i32
    return %arg0, %arg1, %c0_i32 : i32, i32, i32
  }
  func.func @transform_1(%arg0: i32, %arg1: i32) -> (i32, i32, i32) {
    %c0_i32 = arith.constant 0 : i32
    %c0_i32_0 = arith.constant 0 : i32
    %c0_i32_1 = arith.constant 0 : i32
    return %arg0, %c0_i32, %c0_i32_0 : i32, i32, i32
  }
  func.func @transform_2(%arg0: i32, %arg1: i32) -> (i32, i32, i32) {
    %c0_i32 = arith.constant 0 : i32
    %c0_i32_0 = arith.constant 0 : i32
    %c0_i32_1 = arith.constant 0 : i32
    return %arg0, %c0_i32, %c0_i32_0 : i32, i32, i32
  }
  func.func @transform_3(%arg0: i32, %arg1: i32) -> (i32, i32) {
    %c0_i32 = arith.constant 0 : i32
    %c0_i32_0 = arith.constant 0 : i32
    %c0_i32_1 = arith.constant 0 : i32
    return %c0_i32, %c0_i32_0 : i32, i32
  }
  func.func @transform_4(%arg0: i32, %arg1: i32) -> (i32, i32) {
    %c0_i32 = arith.constant 0 : i32
    %c0_i32_0 = arith.constant 0 : i32
    %c0_i32_1 = arith.constant 0 : i32
    return %c0_i32, %c0_i32_0 : i32, i32
  }
  func.func @transform_5(%arg0: i32, %arg1: i32) -> (i32, i32) {
    %c0_i32 = arith.constant 0 : i32
    %c0_i32_0 = arith.constant 0 : i32
    %c0_i32_1 = arith.constant 0 : i32
    return %c0_i32, %c0_i32_0 : i32, i32
  }
  func.func @transform_6(%arg0: i32, %arg1: i32) -> (i32, i32) {
    %c0_i32 = arith.constant 0 : i32
    %c0_i32_0 = arith.constant 0 : i32
    %c0_i32_1 = arith.constant 0 : i32
    return %c0_i32, %c0_i32_0 : i32, i32
  }
  func.func @transform_7(%arg0: i32, %arg1: i32) -> (i32, i32) {
    %c0_i32 = arith.constant 0 : i32
    %c0_i32_0 = arith.constant 0 : i32
    %c0_i32_1 = arith.constant 0 : i32
    return %c0_i32, %c0_i32_0 : i32, i32
  }
  func.func @transform_8(%arg0: i32, %arg1: i32) -> (i32, i32) {
    %c0_i32 = arith.constant 0 : i32
    %c0_i32_0 = arith.constant 0 : i32
    %c0_i32_1 = arith.constant 0 : i32
    return %c0_i32, %c0_i32_0 : i32, i32
  }
  func.func @transform_9(%arg0: i32, %arg1: i32) -> (i32, i32, i32) {
    %c0_i32 = arith.constant 0 : i32
    %c0_i32_0 = arith.constant 0 : i32
    return %arg0, %arg1, %c0_i32 : i32, i32, i32
  }
  func.func @transform_10(%arg0: i32, %arg1: i32) -> (i32, i32, i32) {
    %c0_i32 = arith.constant 0 : i32
    %c0_i32_0 = arith.constant 0 : i32
    return %arg0, %arg1, %c0_i32 : i32, i32, i32
  }
}

</mosaic_0001>

<llo_original>
// kernel: tpu_custom_call.1
$region0: #{tpu_custom_call.1}
  #allocation0 [shape = 'u32[]', space=smem, size = 0x4, offset = 0x4, fixed_abs, tag = 'smem constant byte address 0x4 - core index']
  #allocation1 [shape = 'u32[72,128]{1,0:T(1,128)}', space=vmem, size = 0x9000, scoped, tag = 'internal scratch']
  %s0 = inlined_call_operand.hbm [shape: f32[2,8,32], index: 0, kind: input, shape index: {}]
  %s1 = inlined_call_operand.hbm [shape: f32[2,8,32], index: 1, kind: input, shape index: {}]
  %s2 = inlined_call_operand.hbm [shape: f32[2,8,32], index: 2, kind: input, shape index: {}]
  %s3 = inlined_call_operand.hbm [shape: f32[32,32], index: 3, kind: input, shape index: {}]
  %s4 = inlined_call_operand.hbm [shape: f32[32,32], index: 4, kind: input, shape index: {}]
  %s5 = inlined_call_operand.hbm [shape: f32[32,32], index: 5, kind: input, shape index: {}]
  %s6 = inlined_call_operand.vmem [shape: f32[1,32], index: 6, kind: input, shape index: {}]
  %s7 = inlined_call_operand.vmem [shape: f32[1,32], index: 7, kind: input, shape index: {}]
  %s8 = inlined_call_operand.vmem [shape: f32[1,32], index: 8, kind: input, shape index: {}]
  %s9 = inlined_call_operand.hbm [shape: f32[2,8,8], index: 9, kind: input, shape index: {}]
  %s10 = inlined_call_operand.hbm [shape: f32[2,8,32], index: 10, kind: output, shape index: {}]
  %s11 = sld [smem:[#allocation0]]
  $region101: #{tpu_custom_call.1} parent=0
    _
  %s13 = ssub.s32 1, %s11
  %s14 = scalar_select 0, %s13, %s11
  $region1: #{tpu_custom_call.1} parent=0
    #allocation2 [shape = 'u8[8192]{0}', space=vmem, size = 0x2000, scoped, tag = 'input window, operand 0']
    #allocation3 [shape = 's32[2]{0}', space=sflag, size = 0x8, scoped, tag = 'scoped memory for tpu_custom_call.1']
    #allocation4 [shape = 's32[2]{0}', space=sflag, size = 0x8, scoped, tag = 'scoped memory for tpu_custom_call.1']
    #allocation5 [shape = 'u8[8192]{0}', space=vmem, size = 0x2000, scoped, tag = 'input window, operand 1']
    #allocation6 [shape = 's32[2]{0}', space=sflag, size = 0x8, scoped, tag = 'scoped memory for tpu_custom_call.1']
    #allocation7 [shape = 'u8[8192]{0}', space=vmem, size = 0x2000, scoped, tag = 'input window, operand 2']
    #allocation8 [shape = 'u8[16384]{0}', space=vmem, size = 0x4000, scoped, tag = 'input window, operand 3, single buffered']
    #allocation9 [shape = 's32[1]{0}', space=sflag, size = 0x4, scoped, tag = 'scoped memory for tpu_custom_call.1']
    #allocation10 [shape = 'u8[16384]{0}', space=vmem, size = 0x4000, scoped, tag = 'input window, operand 4, single buffered']
    #allocation11 [shape = 'u8[16384]{0}', space=vmem, size = 0x4000, scoped, tag = 'input window, operand 5, single buffered']
    #allocation12 [shape = 's32[1]{0}', space=sflag, size = 0x4, scoped, tag = 'scoped memory for tpu_custom_call.1']
    #allocation13 [shape = 'u8[8192]{0}', space=vmem, size = 0x2000, scoped, tag = 'input window, operand 9']
    #allocation14 [shape = 'u8[8192]{0}', space=vmem, size = 0x2000, scoped, tag = 'output window, operand 0']
    %15 = vsyncpa [#allocation3], 0
    %s16 = scalar_lea.sflag [#allocation3], 1
    %17 = vsyncpa %s16, 0
    %18 = vsyncpa [#allocation6], 0
    %s19 = scalar_lea.sflag [#allocation6], 1
    %20 = vsyncpa %s19, 0
    %21 = vsyncpa [#allocation9], 0
    %22 = vsyncpa [#allocation12], 0
    %23 = vsyncpa [#allocation4], 0
    %s24 = scalar_lea.sflag [#allocation4], 1
    %25 = vsyncpa %s24, 0
    loop: start=0, step=1, limit=4
    $region2: #{tpu_custom_call.1} parent=1 // loop_pre_header
      _
    $region3: #{tpu_custom_call.1} parent=1 // loop_header
      %s27 = sphi 0, %s31
      %p28 = scmp.ge.s32.totalorder %s27, 4
      %s34 = sphi 0, %s46
      %s35 = sphi 0, %s42
      %s36 = sphi 0, %s34
      %s37 = sphi 0, %s35
      %s38 = sphi 0, %s36
      %s39 = sphi 0, %s37
      %s51 = sphi 0, %s53
      %s54 = sphi 0, %s51
      %s55 = sphi 0, %s54
      %s71 = sphi 0, %s55
      %s77 = sphi 0, %s79
      %s80 = sphi 0, %s77
      %s81 = sphi 0, %s80
      %s97 = sphi 0, %s81
      %s103 = sphi 0, %s105
      %s106 = sphi 0, %s103
      %s107 = sphi 0, %s106
      %s123 = sphi 0, %s107
      %s127 = sphi 0, %s127
      %s129 = sphi 0, %s127
      %s130 = sphi 0, %s129
      %s144 = sphi 0, %s130
      %s148 = sphi 0, %s148
      %s150 = sphi 0, %s148
      %s151 = sphi 0, %s150
      %s165 = sphi 0, %s151
      %s169 = sphi 0, %s169
      %s171 = sphi 0, %s169
      %s172 = sphi 0, %s171
      %s186 = sphi 0, %s172
      %s190 = sphi 0, %s190
      %s192 = sphi 0, %s190
      %s193 = sphi 0, %s192
      %s207 = sphi 0, %s193
      %s211 = sphi 0, %s211
      %s213 = sphi 0, %s211
      %s214 = sphi 0, %s213
      %s228 = sphi 0, %s214
      %s232 = sphi 0, %s232
      %s234 = sphi 0, %s232
      %s235 = sphi 0, %s234
      %s249 = sphi 0, %s235
      %s257 = sphi 0, %s259
      %s260 = sphi 0, %s257
      %s261 = sphi 0, %s260
      %s277 = sphi 0, %s261
      %s285 = sphi 0, %s287
      %s288 = sphi 0, %s285
      %s289 = sphi 0, %s288
      %s305 = sphi 0, %s289
    $region4: #{tpu_custom_call.1} parent=1 // loop_header_branch
      %30 = sbr.rel (%p28) target = $region8
    $region5: #{tpu_custom_call.1} parent=1 // loop_body
      %s32 = ssub.s32 %s27, 1
      %s33 = ssub.s32 %s27, 2
      %s40 = sadd.s32 1, %s35
      %p41 = scmp.ge.s32.totalorder %s40, 1
      %s42 = scalar_select %p41, 0, %s40
      %s43 = sadd.s32 1, %s34
      %s44 = scalar_select %p41, %s43, %s34
      %p45 = scmp.ge.s32.totalorder %s44, 2
      %s46 = scalar_select %p45, 0, %s44
      %s47 = ssub.s32 %s34, %s46
      %s48 = ssub.s32 %s35, %s42
      %s49 = sor.u32 %s47, %s48
      %p50 = scmp.eq.s32.totalorder %s49, 0
      %s52 = sadd.s32 %s51, 1
      %s53 = scalar_select %p50, %s51, %s52
      %p56 = pneg %p50
      %p57 = scmp.eq.s32.totalorder %s27, 1
      %p58 = por %p56, %p57
      %p59 = scmp.ne.s32.totalorder %s51, %s54
      %p60 = scmp.eq.s32.totalorder %s27, 0
      %p61 = por %p59, %p60
      %p62 = scmp.ne.s32.totalorder %s51, %s54
      %p63 = scmp.eq.s32.totalorder %s32, 1
      %p64 = por %p62, %p63
      %p65 = scmp.ne.s32.totalorder %s54, %s55
      %p66 = scmp.eq.s32.totalorder %s32, 0
      %p67 = por %p65, %p66
      %p68 = scmp.ne.s32.totalorder %s54, %s55
      %p69 = scmp.eq.s32.totalorder %s33, 1
      %p70 = por %p68, %p69
      %p72 = scmp.ne.s32.totalorder %s55, %s71
      %p73 = scmp.eq.s32.totalorder %s33, 0
      %p74 = por %p72, %p73
      %s75 = ssub.s32 %s34, %s46
      %p76 = scmp.eq.s32.totalorder %s75, 0
      %s78 = sadd.s32 %s77, 1
      %s79 = scalar_select %p76, %s77, %s78
      %p82 = pneg %p76
      %p83 = scmp.eq.s32.totalorder %s27, 1
      %p84 = por %p82, %p83
      %p85 = scmp.ne.s32.totalorder %s77, %s80
      %p86 = scmp.eq.s32.totalorder %s27, 0
      %p87 = por %p85, %p86
      %p88 = scmp.ne.s32.totalorder %s77, %s80
      %p89 = scmp.eq.s32.totalorder %s32, 1
      %p90 = por %p88, %p89
      %p91 = scmp.ne.s32.totalorder %s80, %s81
      %p92 = scmp.eq.s32.totalorder %s32, 0
      %p93 = por %p91, %p92
      %p94 = scmp.ne.s32.totalorder %s80, %s81
      %p95 = scmp.eq.s32.totalorder %s33, 1
      %p96 = por %p94, %p95
      %p98 = scmp.ne.s32.totalorder %s81, %s97
      %p99 = scmp.eq.s32.totalorder %s33, 0
      %p100 = por %p98, %p99
      %s101 = ssub.s32 %s34, %s46
      %p102 = scmp.eq.s32.totalorder %s101, 0
      %s104 = sadd.s32 %s103, 1
      %s105 = scalar_select %p102, %s103, %s104
      %p108 = pneg %p102
      %p109 = scmp.eq.s32.totalorder %s27, 1
      %p110 = por %p108, %p109
      %p111 = scmp.ne.s32.totalorder %s103, %s106
      %p112 = scmp.eq.s32.totalorder %s27, 0
      %p113 = por %p111, %p112
      %p114 = scmp.ne.s32.totalorder %s103, %s106
      %p115 = scmp.eq.s32.totalorder %s32, 1
      %p116 = por %p114, %p115
      %p117 = scmp.ne.s32.totalorder %s106, %s107
      %p118 = scmp.eq.s32.totalorder %s32, 0
      %p119 = por %p117, %p118
      %p120 = scmp.ne.s32.totalorder %s106, %s107
      %p121 = scmp.eq.s32.totalorder %s33, 1
      %p122 = por %p120, %p121
      %p124 = scmp.ne.s32.totalorder %s107, %s123
      %p125 = scmp.eq.s32.totalorder %s33, 0
      %p126 = por %p124, %p125
      %s128 = sadd.s32 %s127, 1
      %p131 = scmp.eq.s32.totalorder %s27, 1
      %p132 = scmp.ne.s32.totalorder %s127, %s129
      %p133 = scmp.eq.s32.totalorder %s27, 0
      %p134 = por %p132, %p133
      %p135 = scmp.ne.s32.totalorder %s127, %s129
      %p136 = scmp.eq.s32.totalorder %s32, 1
      %p137 = por %p135, %p136
      %p138 = scmp.ne.s32.totalorder %s129, %s130
      %p139 = scmp.eq.s32.totalorder %s32, 0
      %p140 = por %p138, %p139
      %p141 = scmp.ne.s32.totalorder %s129, %s130
      %p142 = scmp.eq.s32.totalorder %s33, 1
      %p143 = por %p141, %p142
      %p145 = scmp.ne.s32.totalorder %s130, %s144
      %p146 = scmp.eq.s32.totalorder %s33, 0
      %p147 = por %p145, %p146
      %s149 = sadd.s32 %s148, 1
      %p152 = scmp.eq.s32.totalorder %s27, 1
      %p153 = scmp.ne.s32.totalorder %s148, %s150
      %p154 = scmp.eq.s32.totalorder %s27, 0
      %p155 = por %p153, %p154
      %p156 = scmp.ne.s32.totalorder %s148, %s150
      %p157 = scmp.eq.s32.totalorder %s32, 1
      %p158 = por %p156, %p157
      %p159 = scmp.ne.s32.totalorder %s150, %s151
      %p160 = scmp.eq.s32.totalorder %s32, 0
      %p161 = por %p159, %p160
      %p162 = scmp.ne.s32.totalorder %s150, %s151
      %p163 = scmp.eq.s32.totalorder %s33, 1
      %p164 = por %p162, %p163
      %p166 = scmp.ne.s32.totalorder %s151, %s165
      %p167 = scmp.eq.s32.totalorder %s33, 0
      %p168 = por %p166, %p167
      %s170 = sadd.s32 %s169, 1
      %p173 = scmp.eq.s32.totalorder %s27, 1
      %p174 = scmp.ne.s32.totalorder %s169, %s171
      %p175 = scmp.eq.s32.totalorder %s27, 0
      %p176 = por %p174, %p175
      %p177 = scmp.ne.s32.totalorder %s169, %s171
      %p178 = scmp.eq.s32.totalorder %s32, 1
      %p179 = por %p177, %p178
      %p180 = scmp.ne.s32.totalorder %s171, %s172
      %p181 = scmp.eq.s32.totalorder %s32, 0
      %p182 = por %p180, %p181
      %p183 = scmp.ne.s32.totalorder %s171, %s172
      %p184 = scmp.eq.s32.totalorder %s33, 1
      %p185 = por %p183, %p184
      %p187 = scmp.ne.s32.totalorder %s172, %s186
      %p188 = scmp.eq.s32.totalorder %s33, 0
      %p189 = por %p187, %p188
      %s191 = sadd.s32 %s190, 1
      %p194 = scmp.eq.s32.totalorder %s27, 1
      %p195 = scmp.ne.s32.totalorder %s190, %s192
      %p196 = scmp.eq.s32.totalorder %s27, 0
      %p197 = por %p195, %p196
      %p198 = scmp.ne.s32.totalorder %s190, %s192
      %p199 = scmp.eq.s32.totalorder %s32, 1
      %p200 = por %p198, %p199
      %p201 = scmp.ne.s32.totalorder %s192, %s193
      %p202 = scmp.eq.s32.totalorder %s32, 0
      %p203 = por %p201, %p202
      %p204 = scmp.ne.s32.totalorder %s192, %s193
      %p205 = scmp.eq.s32.totalorder %s33, 1
      %p206 = por %p204, %p205
      %p208 = scmp.ne.s32.totalorder %s193, %s207
      %p209 = scmp.eq.s32.totalorder %s33, 0
      %p210 = por %p208, %p209
      %s212 = sadd.s32 %s211, 1
      %p215 = scmp.eq.s32.totalorder %s27, 1
      %p216 = scmp.ne.s32.totalorder %s211, %s213
      %p217 = scmp.eq.s32.totalorder %s27, 0
      %p218 = por %p216, %p217
      %p219 = scmp.ne.s32.totalorder %s211, %s213
      %p220 = scmp.eq.s32.totalorder %s32, 1
      %p221 = por %p219, %p220
      %p222 = scmp.ne.s32.totalorder %s213, %s214
      %p223 = scmp.eq.s32.totalorder %s32, 0
      %p224 = por %p222, %p223
      %p225 = scmp.ne.s32.totalorder %s213, %s214
      %p226 = scmp.eq.s32.totalorder %s33, 1
      %p227 = por %p225, %p226
      %p229 = scmp.ne.s32.totalorder %s214, %s228
      %p230 = scmp.eq.s32.totalorder %s33, 0
      %p231 = por %p229, %p230
      %s233 = sadd.s32 %s232, 1
      %p236 = scmp.eq.s32.totalorder %s27, 1
      %p237 = scmp.ne.s32.totalorder %s232, %s234
      %p238 = scmp.eq.s32.totalorder %s27, 0
      %p239 = por %p237, %p238
      %p240 = scmp.ne.s32.totalorder %s232, %s234
      %p241 = scmp.eq.s32.totalorder %s32, 1
      %p242 = por %p240, %p241
      %p243 = scmp.ne.s32.totalorder %s234, %s235
      %p244 = scmp.eq.s32.totalorder %s32, 0
      %p245 = por %p243, %p244
      %p246 = scmp.ne.s32.totalorder %s234, %s235
      %p247 = scmp.eq.s32.totalorder %s33, 1
      %p248 = por %p246, %p247
      %p250 = scmp.ne.s32.totalorder %s235, %s249
      %p251 = scmp.eq.s32.totalorder %s33, 0
      %p252 = por %p250, %p251
      %s253 = ssub.s32 %s34, %s46
      %s254 = ssub.s32 %s35, %s42
      %s255 = sor.u32 %s253, %s254
      %p256 = scmp.eq.s32.totalorder %s255, 0
      %s258 = sadd.s32 %s257, 1
      %s259 = scalar_select %p256, %s257, %s258
      %p262 = pneg %p256
      %p263 = scmp.eq.s32.totalorder %s27, 1
      %p264 = por %p262, %p263
      %p265 = scmp.ne.s32.totalorder %s257, %s260
      %p266 = scmp.eq.s32.totalorder %s27, 0
      %p267 = por %p265, %p266
      %p268 = scmp.ne.s32.totalorder %s257, %s260
      %p269 = scmp.eq.s32.totalorder %s32, 1
      %p270 = por %p268, %p269
      %p271 = scmp.ne.s32.totalorder %s260, %s261
      %p272 = scmp.eq.s32.totalorder %s32, 0
      %p273 = por %p271, %p272
      %p274 = scmp.ne.s32.totalorder %s260, %s261
      %p275 = scmp.eq.s32.totalorder %s33, 1
      %p276 = por %p274, %p275
      %p278 = scmp.ne.s32.totalorder %s261, %s277
      %p279 = scmp.eq.s32.totalorder %s33, 0
      %p280 = por %p278, %p279
      %s281 = ssub.s32 %s34, %s46
      %s282 = ssub.s32 %s35, %s42
      %s283 = sor.u32 %s281, %s282
      %p284 = scmp.eq.s32.totalorder %s283, 0
      %s286 = sadd.s32 %s285, 1
      %s287 = scalar_select %p284, %s285, %s286
      %p290 = pneg %p284
      %p291 = scmp.eq.s32.totalorder %s27, 1
      %p292 = por %p290, %p291
      %p293 = scmp.ne.s32.totalorder %s285, %s288
      %p294 = scmp.eq.s32.totalorder %s27, 0
      %p295 = por %p293, %p294
      %p296 = scmp.ne.s32.totalorder %s285, %s288
      %p297 = scmp.eq.s32.totalorder %s32, 1
      %p298 = por %p296, %p297
      %p299 = scmp.ne.s32.totalorder %s288, %s289
      %p300 = scmp.eq.s32.totalorder %s32, 0
      %p301 = por %p299, %p300
      %p302 = scmp.ne.s32.totalorder %s288, %s289
      %p303 = scmp.eq.s32.totalorder %s33, 1
      %p304 = por %p302, %p303
      %p306 = scmp.ne.s32.totalorder %s289, %s305
      %p307 = scmp.eq.s32.totalorder %s33, 0
      %p308 = por %p306, %p307
      %p309 = scmp.le.s32.totalorder 1, %s27
      %p310 = scmp.lt.s32.totalorder %s27, 3
      %p311 = pnand %p309, %p310
      %p312 = pneg %p311
      // Predicated region
      $region9: #{tpu_custom_call.1} parent=5 // pred_check
        _
      $region10: #{tpu_custom_call.1} parent=5 // pred_check_branch
        %314 = sbr.rel (%p311) target = $region12
      $region11: #{tpu_custom_call.1} parent=5 // pred_region
        %s315 = ssub.s32 %s27, 1
        // Predicated region
        $region13: #{tpu_custom_call.1} parent=11 // pred_check
          %p316 = pneg %p140
        $region14: #{tpu_custom_call.1} parent=11 // pred_check_branch
          %318 = sbr.rel (%p316) target = $region16
        $region15: #{tpu_custom_call.1} parent=11 // pred_region
          %320 = vsyncadd [#allocation9], 0
          %s321 = sshll.u32 %s3, 4
          %s322 = int_to_ptr.hbm [resolvable:$true] %s321
          %s323 = sshll.u32 [#allocation8], 4
          %s324 = int_to_ptr.vmem [resolvable:$true] %s323
          %329 = dma.hbm_to_vmem [thread:$0]  %s322, 512, %s324, [#allocation9], 128, 128, 8
        $region16: #{tpu_custom_call.1} parent=11 // pred_fallthru
          _
        // Predicated region
        $region17: #{tpu_custom_call.1} parent=11 // pred_check
          %p330 = pneg %p161
        $region18: #{tpu_custom_call.1} parent=11 // pred_check_branch
          %332 = sbr.rel (%p330) target = $region20
        $region19: #{tpu_custom_call.1} parent=11 // pred_region
          %334 = vsyncadd [#allocation9], 0
          %s335 = sshll.u32 %s4, 4
          %s336 = int_to_ptr.hbm [resolvable:$true] %s335
          %s337 = sshll.u32 [#allocation10], 4
          %s338 = int_to_ptr.vmem [resolvable:$true] %s337
          %343 = dma.hbm_to_vmem [thread:$0]  %s336, 512, %s338, [#allocation9], 128, 128, 8
        $region20: #{tpu_custom_call.1} parent=11 // pred_fallthru
          _
        // Predicated region
        $region21: #{tpu_custom_call.1} parent=11 // pred_check
          %p344 = pneg %p182
        $region22: #{tpu_custom_call.1} parent=11 // pred_check_branch
          %346 = sbr.rel (%p344) target = $region24
        $region23: #{tpu_custom_call.1} parent=11 // pred_region
          %348 = vsyncadd [#allocation12], 0
          %s349 = sshll.u32 %s5, 4
          %s350 = int_to_ptr.hbm [resolvable:$true] %s349
          %s351 = sshll.u32 [#allocation11], 4
          %s352 = int_to_ptr.vmem [resolvable:$true] %s351
          %357 = dma.hbm_to_vmem [thread:$0]  %s350, 512, %s352, [#allocation12], 128, 128, 8
        $region24: #{tpu_custom_call.1} parent=11 // pred_fallthru
          _
        // Predicated region
        $region25: #{tpu_custom_call.1} parent=11 // pred_check
          %p358 = pneg %p203
        $region26: #{tpu_custom_call.1} parent=11 // pred_check_branch
          %360 = sbr.rel (%p358) target = $region28
        $region27: #{tpu_custom_call.1} parent=11 // pred_region
          _
        $region28: #{tpu_custom_call.1} parent=11 // pred_fallthru
          _
        // Predicated region
        $region29: #{tpu_custom_call.1} parent=11 // pred_check
          %p361 = pneg %p224
        $region30: #{tpu_custom_call.1} parent=11 // pred_check_branch
          %363 = sbr.rel (%p361) target = $region32
        $region31: #{tpu_custom_call.1} parent=11 // pred_region
          _
        $region32: #{tpu_custom_call.1} parent=11 // pred_fallthru
          _
        // Predicated region
        $region33: #{tpu_custom_call.1} parent=11 // pred_check
          %p364 = pneg %p245
        $region34: #{tpu_custom_call.1} parent=11 // pred_check_branch
          %366 = sbr.rel (%p364) target = $region36
        $region35: #{tpu_custom_call.1} parent=11 // pred_region
          _
        $region36: #{tpu_custom_call.1} parent=11 // pred_fallthru
          _
      $region12: #{tpu_custom_call.1} parent=5 // pred_fallthru
        _
      %p367 = scmp.lt.s32.totalorder %s27, 2
      // Predicated region
      $region37: #{tpu_custom_call.1} parent=5 // pred_check
        %p368 = pneg %p367
      $region38: #{tpu_custom_call.1} parent=5 // pred_check_branch
        %370 = sbr.rel (%p368) target = $region40
      $region39: #{tpu_custom_call.1} parent=5 // pred_region
        // Predicated region
        $region41: #{tpu_custom_call.1} parent=39 // pred_check
          %p371 = pneg %p61
        $region42: #{tpu_custom_call.1} parent=39 // pred_check_branch
          %373 = sbr.rel (%p371) target = $region44
        $region43: #{tpu_custom_call.1} parent=39 // pred_region
          %s374 = sand.u32 %s27, 1
          %s375 = scalar_lea.sflag [#allocation3], %s374
          %s376 = sand.u32 %s51, 1
          %s377 = smul.addr %s376, 8
          %s378 = scalar_lea.vmem [#allocation2], %s377
          %380 = vsyncadd %s375, 0
          %s381 = sadd.s32 %s35, %s34
          %s382 = smul.addr %s381, 8
          %s383 = scalar_lea.hbm %s0, %s382
          %s385 = sshll.u32 %s383, 4
          %s386 = int_to_ptr.hbm [resolvable:$true] %s385
          %s387 = sshll.u32 %s378, 4
          %s388 = int_to_ptr.vmem [resolvable:$true] %s387
          %390 = dma.hbm_to_vmem [thread:$0]  %s386, 128, %s388, %s375
        $region44: #{tpu_custom_call.1} parent=39 // pred_fallthru
          _
        // Predicated region
        $region45: #{tpu_custom_call.1} parent=39 // pred_check
          %p391 = pneg %p87
        $region46: #{tpu_custom_call.1} parent=39 // pred_check_branch
          %393 = sbr.rel (%p391) target = $region48
        $region47: #{tpu_custom_call.1} parent=39 // pred_region
          %s394 = sand.u32 %s27, 1
          %s395 = scalar_lea.sflag [#allocation6], %s394
          %s396 = sand.u32 %s77, 1
          %s397 = smul.addr %s396, 8
          %s398 = scalar_lea.vmem [#allocation5], %s397
          %400 = vsyncadd %s395, 0
          %s401 = smul.addr %s34, 8
          %s402 = scalar_lea.hbm %s1, %s401
          %s404 = sshll.u32 %s402, 4
          %s405 = int_to_ptr.hbm [resolvable:$true] %s404
          %s406 = sshll.u32 %s398, 4
          %s407 = int_to_ptr.vmem [resolvable:$true] %s406
          %409 = dma.hbm_to_vmem [thread:$0]  %s405, 128, %s407, %s395
        $region48: #{tpu_custom_call.1} parent=39 // pred_fallthru
          _
        // Predicated region
        $region49: #{tpu_custom_call.1} parent=39 // pred_check
          %p410 = pneg %p113
        $region50: #{tpu_custom_call.1} parent=39 // pred_check_branch
          %412 = sbr.rel (%p410) target = $region52
        $region51: #{tpu_custom_call.1} parent=39 // pred_region
          %s413 = sand.u32 %s27, 1
          %s414 = scalar_lea.sflag [#allocation6], %s413
          %s415 = sand.u32 %s103, 1
          %s416 = smul.addr %s415, 8
          %s417 = scalar_lea.vmem [#allocation7], %s416
          %419 = vsyncadd %s414, 0
          %s420 = smul.addr %s34, 8
          %s421 = scalar_lea.hbm %s2, %s420
          %s423 = sshll.u32 %s421, 4
          %s424 = int_to_ptr.hbm [resolvable:$true] %s423
          %s425 = sshll.u32 %s417, 4
          %s426 = int_to_ptr.vmem [resolvable:$true] %s425
          %428 = dma.hbm_to_vmem [thread:$0]  %s424, 128, %s426, %s414
        $region52: #{tpu_custom_call.1} parent=39 // pred_fallthru
          _
        // Predicated region
        $region53: #{tpu_custom_call.1} parent=39 // pred_check
          %p429 = pneg %p267
        $region54: #{tpu_custom_call.1} parent=39 // pred_check_branch
          %431 = sbr.rel (%p429) target = $region56
        $region55: #{tpu_custom_call.1} parent=39 // pred_region
          %s432 = sand.u32 %s27, 1
          %s433 = scalar_lea.sflag [#allocation3], %s432
          %s434 = sand.u32 %s257, 1
          %s435 = smul.addr %s434, 8
          %s436 = scalar_lea.vmem [#allocation13], %s435
          %438 = vsyncadd %s433, 0
          %s439 = sadd.s32 %s35, %s34
          %s440 = smul.addr %s439, 8
          %s441 = scalar_lea.hbm %s9, %s440
          %s443 = sshll.u32 %s441, 4
          %s444 = int_to_ptr.hbm [resolvable:$true] %s443
          %s445 = sshll.u32 %s436, 4
          %s446 = int_to_ptr.vmem [resolvable:$true] %s445
          %448 = dma.hbm_to_vmem [thread:$0]  %s444, 128, %s446, %s433
        $region56: #{tpu_custom_call.1} parent=39 // pred_fallthru
          _
      $region40: #{tpu_custom_call.1} parent=5 // pred_fallthru
        _
      %p449 = scmp.le.s32.totalorder 1, %s27
      %p450 = scmp.lt.s32.totalorder %s27, 3
      %p451 = pnand %p449, %p450
      %p452 = pneg %p451
      // Predicated region
      $region57: #{tpu_custom_call.1} parent=5 // pred_check
        _
      $region58: #{tpu_custom_call.1} parent=5 // pred_check_branch
        %454 = sbr.rel (%p451) target = $region60
      $region59: #{tpu_custom_call.1} parent=5 // pred_region
        %s455 = ssub.s32 %s27, 1
        %s456 = sand.u32 %s32, 1
        %s457 = scalar_lea.sflag [#allocation3], %s456
        %s458 = sand.u32 %s54, 1
        %s459 = smul.addr %s458, 8
        %s460 = scalar_lea.vmem [#allocation2], %s459
        // Predicated region
        $region61: #{tpu_custom_call.1} parent=59 // pred_check
          %p461 = pneg %p67
        $region62: #{tpu_custom_call.1} parent=59 // pred_check_branch
          %463 = sbr.rel (%p461) target = $region64
        $region63: #{tpu_custom_call.1} parent=59 // pred_region
          %465 = dma.done %s457, 128
        $region64: #{tpu_custom_call.1} parent=59 // pred_fallthru
          _
        %s466 = sand.u32 %s32, 1
        %s467 = scalar_lea.sflag [#allocation6], %s466
        %s468 = sand.u32 %s80, 1
        %s469 = smul.addr %s468, 8
        %s470 = scalar_lea.vmem [#allocation5], %s469
        // Predicated region
        $region65: #{tpu_custom_call.1} parent=59 // pred_check
          %p471 = pneg %p93
        $region66: #{tpu_custom_call.1} parent=59 // pred_check_branch
          %473 = sbr.rel (%p471) target = $region68
        $region67: #{tpu_custom_call.1} parent=59 // pred_region
          %475 = dma.done %s467, 128
        $region68: #{tpu_custom_call.1} parent=59 // pred_fallthru
          _
        %s476 = sand.u32 %s32, 1
        %s477 = scalar_lea.sflag [#allocation6], %s476
        %s478 = sand.u32 %s106, 1
        %s479 = smul.addr %s478, 8
        %s480 = scalar_lea.vmem [#allocation7], %s479
        // Predicated region
        $region69: #{tpu_custom_call.1} parent=59 // pred_check
          %p481 = pneg %p119
        $region70: #{tpu_custom_call.1} parent=59 // pred_check_branch
          %483 = sbr.rel (%p481) target = $region72
        $region71: #{tpu_custom_call.1} parent=59 // pred_region
          %485 = dma.done %s477, 128
        $region72: #{tpu_custom_call.1} parent=59 // pred_fallthru
          _
        // Predicated region
        $region73: #{tpu_custom_call.1} parent=59 // pred_check
          %p486 = pneg %p140
        $region74: #{tpu_custom_call.1} parent=59 // pred_check_branch
          %488 = sbr.rel (%p486) target = $region76
        $region75: #{tpu_custom_call.1} parent=59 // pred_region
          %490 = dma.done [#allocation9], 512
        $region76: #{tpu_custom_call.1} parent=59 // pred_fallthru
          _
        // Predicated region
        $region77: #{tpu_custom_call.1} parent=59 // pred_check
          %p491 = pneg %p161
        $region78: #{tpu_custom_call.1} parent=59 // pred_check_branch
          %493 = sbr.rel (%p491) target = $region80
        $region79: #{tpu_custom_call.1} parent=59 // pred_region
          %495 = dma.done [#allocation9], 512
        $region80: #{tpu_custom_call.1} parent=59 // pred_fallthru
          _
        // Predicated region
        $region81: #{tpu_custom_call.1} parent=59 // pred_check
          %p496 = pneg %p182
        $region82: #{tpu_custom_call.1} parent=59 // pred_check_branch
          %498 = sbr.rel (%p496) target = $region84
        $region83: #{tpu_custom_call.1} parent=59 // pred_region
          %500 = dma.done [#allocation12], 512
        $region84: #{tpu_custom_call.1} parent=59 // pred_fallthru
          _
        %s501 = sand.u32 %s32, 1
        %s502 = scalar_lea.sflag [#allocation3], %s501
        %s503 = sand.u32 %s260, 1
        %s504 = smul.addr %s503, 8
        %s505 = scalar_lea.vmem [#allocation13], %s504
        // Predicated region
        $region85: #{tpu_custom_call.1} parent=59 // pred_check
          %p506 = pneg %p273
        $region86: #{tpu_custom_call.1} parent=59 // pred_check_branch
          %508 = sbr.rel (%p506) target = $region88
        $region87: #{tpu_custom_call.1} parent=59 // pred_region
          %510 = dma.done %s502, 128
        $region88: #{tpu_custom_call.1} parent=59 // pred_fallthru
          _
        %s511 = sand.u32 %s32, 1
        %s512 = scalar_lea.sflag [#allocation3], %s511
        %s513 = sand.u32 %s54, 1
        %s514 = smul.addr %s513, 8
        %s515 = scalar_lea.vmem [#allocation2], %s514
        %p516 = pneg %p67
        %p517 = pneg %p64
        %s518 = sand.u32 %s32, 1
        %s519 = scalar_lea.sflag [#allocation6], %s518
        %s520 = sand.u32 %s80, 1
        %s521 = smul.addr %s520, 8
        %s522 = scalar_lea.vmem [#allocation5], %s521
        %p523 = pneg %p93
        %p524 = pneg %p90
        %s525 = sand.u32 %s32, 1
        %s526 = scalar_lea.sflag [#allocation6], %s525
        %s527 = sand.u32 %s106, 1
        %s528 = smul.addr %s527, 8
        %s529 = scalar_lea.vmem [#allocation7], %s528
        %p530 = pneg %p119
        %p531 = pneg %p116
        %p532 = pneg %p140
        %p533 = pneg %p137
        %p534 = pneg %p161
        %p535 = pneg %p158
        %p536 = pneg %p182
        %p537 = pneg %p179
        %p538 = pneg %p203
        %p539 = pneg %p200
        %p540 = pneg %p224
        %p541 = pneg %p221
        %p542 = pneg %p245
        %p543 = pneg %p242
        %s544 = sand.u32 %s32, 1
        %s545 = scalar_lea.sflag [#allocation3], %s544
        %s546 = sand.u32 %s260, 1
        %s547 = smul.addr %s546, 8
        %s548 = scalar_lea.vmem [#allocation13], %s547
        %p549 = pneg %p273
        %p550 = pneg %p270
        %p551 = pneg %p301
        %p552 = pneg %p298
        %s553 = sand.u32 %s288, 1
        %s554 = scalar_lea.sflag [#allocation4], %s553
        %s555 = sand.u32 %s288, 1
        %s556 = smul.addr %s555, 8
        %s557 = scalar_lea.vmem [#allocation14], %s556
        %v558 = vld [vmem:[%s460] sm:$0xff]
        %v559 = vld [vmem:[%s470] sm:$0xff]
        %v560 = vld [vmem:[%s480] sm:$0xff]
        %v561 = vld [vmem:[#allocation8] sm:$0xff]
        %v562 = vld [vmem:[#allocation8 + $0x8] sm:$0xff]
        %v563 = vld [vmem:[#allocation8 + $0x10] sm:$0xff]
        %v564 = vld [vmem:[#allocation8 + $0x18] sm:$0xff]
        %v565 = vld [vmem:[%s6] sm:$0x1]
        %v567 = vperm.slane %v565, 0
        %vm569 = vcmask 261120
        %v571 = vsel %vm569, %v558, 0
        %573 = vmatpush.msra.mxu0 0.0
        %574 = vmatpush.msra.mxu0 0.0
        %575 = vmatpush.msra.mxu0 0.0
        %576 = vmatpush.msra.mxu0 0.0
        %577 = vmatpush.msra.mxu0 0.0
        %578 = vmatpush.msra.mxu0 0.0
        %579 = vmatpush.msra.mxu0 0.0
        %580 = vmatpush.msra.mxu0 0.0
        %581 = vmatpush.msra.mxu0 0.0
        %582 = vmatpush.msra.mxu0 0.0
        %583 = vmatpush.msra.mxu0 0.0
        %584 = vmatpush.msra.mxu0 0.0
        %585 = vmatpush.msra.mxu0 %v564
        %586 = vmatpush.msra.mxu0 %v563
        %587 = vmatpush.msra.mxu0 %v562
        %588 = vmatpush.msra.mxu0 %v561
        %589 = vmatmul.f32.gmra.mxu0 %v571
        %v590 = vpop.f32.mrf.mxu0
        %v591 = vadd.f32 %v567, %v590
        %592 = vdwg.mxu0
        %v593 = vld [vmem:[#allocation10] sm:$0xff]
        %v594 = vld [vmem:[#allocation10 + $0x8] sm:$0xff]
        %v595 = vld [vmem:[#allocation10 + $0x10] sm:$0xff]
        %v596 = vld [vmem:[#allocation10 + $0x18] sm:$0xff]
        %v597 = vld [vmem:[%s7] sm:$0x1]
        %v599 = vperm.slane %v597, 0
        %v602 = vsel %vm569, %v559, 0
        %604 = vmatpush.msra.mxu0 0.0
        %605 = vmatpush.msra.mxu0 0.0
        %606 = vmatpush.msra.mxu0 0.0
        %607 = vmatpush.msra.mxu0 0.0
        %608 = vmatpush.msra.mxu0 0.0
        %609 = vmatpush.msra.mxu0 0.0
        %610 = vmatpush.msra.mxu0 0.0
        %611 = vmatpush.msra.mxu0 0.0
        %612 = vmatpush.msra.mxu0 0.0
        %613 = vmatpush.msra.mxu0 0.0
        %614 = vmatpush.msra.mxu0 0.0
        %615 = vmatpush.msra.mxu0 0.0
        %616 = vmatpush.msra.mxu0 %v596
        %617 = vmatpush.msra.mxu0 %v595
        %618 = vmatpush.msra.mxu0 %v594
        %619 = vmatpush.msra.mxu0 %v593
        %620 = vmatmul.f32.gmra.mxu0 %v602
        %v621 = vpop.f32.mrf.mxu0
        %v622 = vadd.f32 %v599, %v621
        %623 = vdwg.mxu0
        %v624 = vld [vmem:[#allocation11] sm:$0xff]
        %v625 = vld [vmem:[#allocation11 + $0x8] sm:$0xff]
        %v626 = vld [vmem:[#allocation11 + $0x10] sm:$0xff]
        %v627 = vld [vmem:[#allocation11 + $0x18] sm:$0xff]
        %v628 = vld [vmem:[%s8] sm:$0x1]
        %v630 = vperm.slane %v628, 0
        %v633 = vsel %vm569, %v560, 0
        %635 = vmatpush.msra.mxu0 0.0
        %636 = vmatpush.msra.mxu0 0.0
        %637 = vmatpush.msra.mxu0 0.0
        %638 = vmatpush.msra.mxu0 0.0
        %639 = vmatpush.msra.mxu0 0.0
        %640 = vmatpush.msra.mxu0 0.0
        %641 = vmatpush.msra.mxu0 0.0
        %642 = vmatpush.msra.mxu0 0.0
        %643 = vmatpush.msra.mxu0 0.0
        %644 = vmatpush.msra.mxu0 0.0
        %645 = vmatpush.msra.mxu0 0.0
        %646 = vmatpush.msra.mxu0 0.0
        %647 = vmatpush.msra.mxu0 %v627
        %648 = vmatpush.msra.mxu0 %v626
        %649 = vmatpush.msra.mxu0 %v625
        %650 = vmatpush.msra.mxu0 %v624
        %651 = vmatmul.f32.gmra.mxu0 %v633
        %v652 = vpop.f32.mrf.mxu0
        %v653 = vadd.f32 %v630, %v652
        %654 = vdwg.mxu0
        %v655 = vmul.f32 %v591, 0.35355338
        %v656 = vld [vmem:[%s505] sm:$0xff]
        %vm657 = vcmask 64512
        %v659 = vsel %vm657, %v655, 0
        %v662 = vsel %vm657, %v622, 0
        %664 = vmatpush.xpose.msra.mxu0 0.0
        %665 = vmatpush.xpose.msra.mxu0 0.0
        %666 = vmatpush.xpose.msra.mxu0 0.0
        %667 = vmatpush.xpose.msra.mxu0 0.0
        %668 = vmatpush.xpose.msra.mxu0 0.0
        %669 = vmatpush.xpose.msra.mxu0 0.0
        %670 = vmatpush.xpose.msra.mxu0 0.0
        %671 = vmatpush.xpose.msra.mxu0 0.0
        %672 = vmatpush.xpose.msra.mxu0 0.0
        %673 = vmatpush.xpose.msra.mxu0 0.0
        %674 = vmatpush.xpose.msra.mxu0 0.0
        %675 = vmatpush.xpose.msra.mxu0 0.0
        %676 = vmatpush.xpose.msra.mxu0 0.0
        %677 = vmatpush.xpose.msra.mxu0 0.0
        %678 = vmatpush.xpose.msra.mxu0 0.0
        %679 = vmatpush.xpose.msra.mxu0 %v662
        %680 = vmatmul.f32.gmra.mxu0 %v659
        %v681 = vpop.f32.mrf.mxu0
        %v682 = vadd.f32 %v656, %v681
        %683 = vdwg.mxu0
        %v685 = vsel %vm657, %v682, 0
        %687 = vmatpush.msra.mxu0 0.0
        %688 = vmatpush.msra.mxu0 0.0
        %689 = vmatpush.msra.mxu0 0.0
        %690 = vmatpush.msra.mxu0 0.0
        %691 = vmatpush.msra.mxu0 0.0
        %692 = vmatpush.msra.mxu0 0.0
        %693 = vmatpush.msra.mxu0 0.0
        %694 = vmatpush.msra.mxu0 0.0
        %695 = vmatpush.msra.mxu0 0.0
        %696 = vmatpush.msra.mxu0 0.0
        %697 = vmatpush.msra.mxu0 0.0
        %698 = vmatpush.msra.mxu0 0.0
        %699 = vmatpush.msra.mxu0 0.0
        %700 = vmatpush.msra.mxu0 0.0
        %701 = vmatpush.msra.mxu0 0.0
        %702 = vmatpush.msra.mxu0 %v653
        %703 = vmatmul.f32.gmra.mxu0 %v685
        %v704 = vpop.f32.mrf.mxu0
        %v705 = vadd.f32 0.0, %v704
        %706 = vdwg.mxu0
        %707 = vrot.lane.b32.xlu0 %v655, 120
        %v708 = vpop.permute.xlu0 %707
        %709 = vrot.lane.b32.xlu0 %v622, 120
        %v710 = vpop.permute.xlu0 %709
        %v711 = vsel %vm657, %v708, 0
        %v713 = vsel %vm657, %v710, 0
        %715 = vmatpush.xpose.msra.mxu0 0.0
        %716 = vmatpush.xpose.msra.mxu0 0.0
        %717 = vmatpush.xpose.msra.mxu0 0.0
        %718 = vmatpush.xpose.msra.mxu0 0.0
        %719 = vmatpush.xpose.msra.mxu0 0.0
        %720 = vmatpush.xpose.msra.mxu0 0.0
        %721 = vmatpush.xpose.msra.mxu0 0.0
        %722 = vmatpush.xpose.msra.mxu0 0.0
        %723 = vmatpush.xpose.msra.mxu0 0.0
        %724 = vmatpush.xpose.msra.mxu0 0.0
        %725 = vmatpush.xpose.msra.mxu0 0.0
        %726 = vmatpush.xpose.msra.mxu0 0.0
        %727 = vmatpush.xpose.msra.mxu0 0.0
        %728 = vmatpush.xpose.msra.mxu0 0.0
        %729 = vmatpush.xpose.msra.mxu0 0.0
        %730 = vmatpush.xpose.msra.mxu0 %v713
        %731 = vmatmul.f32.gmra.mxu0 %v711
        %v732 = vpop.f32.mrf.mxu0
        %v733 = vadd.f32 %v656, %v732
        %734 = vdwg.mxu0
        %736 = vrot.lane.b32.xlu0 %v653, 120
        %v737 = vpop.permute.xlu0 %736
        %v740 = vsel %vm657, %v733, 0
        %742 = vmatpush.msra.mxu0 0.0
        %743 = vmatpush.msra.mxu0 0.0
        %744 = vmatpush.msra.mxu0 0.0
        %745 = vmatpush.msra.mxu0 0.0
        %746 = vmatpush.msra.mxu0 0.0
        %747 = vmatpush.msra.mxu0 0.0
        %748 = vmatpush.msra.mxu0 0.0
        %749 = vmatpush.msra.mxu0 0.0
        %750 = vmatpush.msra.mxu0 0.0
        %751 = vmatpush.msra.mxu0 0.0
        %752 = vmatpush.msra.mxu0 0.0
        %753 = vmatpush.msra.mxu0 0.0
        %754 = vmatpush.msra.mxu0 0.0
        %755 = vmatpush.msra.mxu0 0.0
        %756 = vmatpush.msra.mxu0 0.0
        %757 = vmatpush.msra.mxu0 %v737
        %758 = vmatmul.f32.gmra.mxu0 %v740
        %v759 = vpop.f32.mrf.mxu0
        %v760 = vadd.f32 0.0, %v759
        %761 = vdwg.mxu0
        %762 = vrot.lane.b32.xlu0 %v655, 112
        %v763 = vpop.permute.xlu0 %762
        %764 = vrot.lane.b32.xlu0 %v622, 112
        %v765 = vpop.permute.xlu0 %764
        %v766 = vsel %vm657, %v763, 0
        %v768 = vsel %vm657, %v765, 0
        %770 = vmatpush.xpose.msra.mxu0 0.0
        %771 = vmatpush.xpose.msra.mxu0 0.0
        %772 = vmatpush.xpose.msra.mxu0 0.0
        %773 = vmatpush.xpose.msra.mxu0 0.0
        %774 = vmatpush.xpose.msra.mxu0 0.0
        %775 = vmatpush.xpose.msra.mxu0 0.0
        %776 = vmatpush.xpose.msra.mxu0 0.0
        %777 = vmatpush.xpose.msra.mxu0 0.0
        %778 = vmatpush.xpose.msra.mxu0 0.0
        %779 = vmatpush.xpose.msra.mxu0 0.0
        %780 = vmatpush.xpose.msra.mxu0 0.0
        %781 = vmatpush.xpose.msra.mxu0 0.0
        %782 = vmatpush.xpose.msra.mxu0 0.0
        %783 = vmatpush.xpose.msra.mxu0 0.0
        %784 = vmatpush.xpose.msra.mxu0 0.0
        %785 = vmatpush.xpose.msra.mxu0 %v768
        %786 = vmatmul.f32.gmra.mxu0 %v766
        %v787 = vpop.f32.mrf.mxu0
        %v788 = vadd.f32 %v656, %v787
        %789 = vdwg.mxu0
        %790 = vrot.lane.b32.xlu0 %v653, 112
        %v791 = vpop.permute.xlu0 %790
        %v794 = vsel %vm657, %v788, 0
        %796 = vmatpush.msra.mxu0 0.0
        %797 = vmatpush.msra.mxu0 0.0
        %798 = vmatpush.msra.mxu0 0.0
        %799 = vmatpush.msra.mxu0 0.0
        %800 = vmatpush.msra.mxu0 0.0
        %801 = vmatpush.msra.mxu0 0.0
        %802 = vmatpush.msra.mxu0 0.0
        %803 = vmatpush.msra.mxu0 0.0
        %804 = vmatpush.msra.mxu0 0.0
        %805 = vmatpush.msra.mxu0 0.0
        %806 = vmatpush.msra.mxu0 0.0
        %807 = vmatpush.msra.mxu0 0.0
        %808 = vmatpush.msra.mxu0 0.0
        %809 = vmatpush.msra.mxu0 0.0
        %810 = vmatpush.msra.mxu0 0.0
        %811 = vmatpush.msra.mxu0 %v791
        %812 = vmatmul.f32.gmra.mxu0 %v794
        %v813 = vpop.f32.mrf.mxu0
        %v814 = vadd.f32 0.0, %v813
        %815 = vdwg.mxu0
        %816 = vrot.lane.b32.xlu0 %v655, 104
        %v817 = vpop.permute.xlu0 %816
        %818 = vrot.lane.b32.xlu0 %v622, 104
        %v819 = vpop.permute.xlu0 %818
        %v820 = vsel %vm657, %v817, 0
        %v822 = vsel %vm657, %v819, 0
        %824 = vmatpush.xpose.msra.mxu0 0.0
        %825 = vmatpush.xpose.msra.mxu0 0.0
        %826 = vmatpush.xpose.msra.mxu0 0.0
        %827 = vmatpush.xpose.msra.mxu0 0.0
        %828 = vmatpush.xpose.msra.mxu0 0.0
        %829 = vmatpush.xpose.msra.mxu0 0.0
        %830 = vmatpush.xpose.msra.mxu0 0.0
        %831 = vmatpush.xpose.msra.mxu0 0.0
        %832 = vmatpush.xpose.msra.mxu0 0.0
        %833 = vmatpush.xpose.msra.mxu0 0.0
        %834 = vmatpush.xpose.msra.mxu0 0.0
        %835 = vmatpush.xpose.msra.mxu0 0.0
        %836 = vmatpush.xpose.msra.mxu0 0.0
        %837 = vmatpush.xpose.msra.mxu0 0.0
        %838 = vmatpush.xpose.msra.mxu0 0.0
        %839 = vmatpush.xpose.msra.mxu0 %v822
        %840 = vmatmul.f32.gmra.mxu0 %v820
        %v841 = vpop.f32.mrf.mxu0
        %v842 = vadd.f32 %v656, %v841
        %843 = vdwg.mxu0
        %844 = vrot.lane.b32.xlu0 %v653, 104
        %v845 = vpop.permute.xlu0 %844
        %v848 = vsel %vm657, %v842, 0
        %850 = vmatpush.msra.mxu0 0.0
        %851 = vmatpush.msra.mxu0 0.0
        %852 = vmatpush.msra.mxu0 0.0
        %853 = vmatpush.msra.mxu0 0.0
        %854 = vmatpush.msra.mxu0 0.0
        %855 = vmatpush.msra.mxu0 0.0
        %856 = vmatpush.msra.mxu0 0.0
        %857 = vmatpush.msra.mxu0 0.0
        %858 = vmatpush.msra.mxu0 0.0
        %859 = vmatpush.msra.mxu0 0.0
        %860 = vmatpush.msra.mxu0 0.0
        %861 = vmatpush.msra.mxu0 0.0
        %862 = vmatpush.msra.mxu0 0.0
        %863 = vmatpush.msra.mxu0 0.0
        %864 = vmatpush.msra.mxu0 0.0
        %865 = vmatpush.msra.mxu0 %v845
        %866 = vmatmul.f32.gmra.mxu0 %v848
        %v867 = vpop.f32.mrf.mxu0
        %v868 = vadd.f32 0.0, %v867
        %869 = vdwg.mxu0
        %871 = vrot.lane.b32.xlu0 %v760, 8
        %v872 = vpop.permute.xlu0 %871
        %875 = vrot.lane.b32.xlu0 %v814, 16
        %v876 = vpop.permute.xlu0 %875
        %879 = vrot.lane.b32.xlu0 %v868, 24
        %v880 = vpop.permute.xlu0 %879
        %v882 = vsel %vm657, %v705, %v872
        %vm883 = vcmask 130048
        %v884 = vsel %vm883, %v882, %v876
        %vm885 = vcmask 195584
        %v886 = vsel %vm885, %v884, %v880
        %887 = vst.msk [vmem:[%s557] sm:$0xff] %vm569, %v886
        %s888 = sand.u32 %s288, 1
        %s889 = scalar_lea.sflag [#allocation4], %s888
        %s890 = sand.u32 %s288, 1
        %s891 = smul.addr %s890, 8
        %s892 = scalar_lea.vmem [#allocation14], %s891
        // Predicated region
        $region89: #{tpu_custom_call.1} parent=59 // pred_check
          %p893 = pneg %p298
        $region90: #{tpu_custom_call.1} parent=59 // pred_check_branch
          %895 = sbr.rel (%p893) target = $region92
        $region91: #{tpu_custom_call.1} parent=59 // pred_region
          %897 = vsyncadd %s889, 0
          %s898 = sadd.s32 %s37, %s36
          %s899 = smul.addr %s898, 8
          %s900 = scalar_lea.hbm %s10, %s899
          %s902 = sshll.u32 %s892, 4
          %s903 = int_to_ptr.vmem [resolvable:$true] %s902
          %s904 = sshll.u32 %s900, 4
          %s905 = int_to_ptr.hbm [resolvable:$true] %s904
          %907 = dma.vmem_to_hbm [thread:$0]  %s903, 128, %s905, %s889
        $region92: #{tpu_custom_call.1} parent=59 // pred_fallthru
          _
      $region60: #{tpu_custom_call.1} parent=5 // pred_fallthru
        _
      %p908 = scmp.le.s32.totalorder 2, %s27
      // Predicated region
      $region93: #{tpu_custom_call.1} parent=5 // pred_check
        %p909 = pneg %p908
      $region94: #{tpu_custom_call.1} parent=5 // pred_check_branch
        %911 = sbr.rel (%p909) target = $region96
      $region95: #{tpu_custom_call.1} parent=5 // pred_region
        %s912 = ssub.s32 %s27, 2
        // Predicated region
        $region97: #{tpu_custom_call.1} parent=95 // pred_check
          %p913 = pneg %p304
        $region98: #{tpu_custom_call.1} parent=95 // pred_check_branch
          %915 = sbr.rel (%p913) target = $region100
        $region99: #{tpu_custom_call.1} parent=95 // pred_region
          %s916 = sand.u32 %s289, 1
          %s917 = scalar_lea.sflag [#allocation4], %s916
          %s918 = sand.u32 %s289, 1
          %s919 = smul.addr %s918, 8
          %s920 = scalar_lea.vmem [#allocation14], %s919
          %922 = dma.done %s917, 128
        $region100: #{tpu_custom_call.1} parent=95 // pred_fallthru
          _
      $region96: #{tpu_custom_call.1} parent=5 // pred_fallthru
        _
    $region6: #{tpu_custom_call.1} parent=1 // loop_footer
      %s31 = sadd.s32 1, %s27
    $region7: #{tpu_custom_call.1} parent=1 // loop_footer_branch
      %26 = sbr.rel target = $region3
    $region8: #{tpu_custom_call.1} parent=1 // loop_exit
      _
    %923 = vsyncpa [#allocation3], 1
    %s924 = scalar_lea.sflag [#allocation3], 1
    %925 = vsyncpa %s924, 1
    %926 = vsyncpa [#allocation6], 1
    %s927 = scalar_lea.sflag [#allocation6], 1
    %928 = vsyncpa %s927, 1
    %929 = vsyncpa [#allocation9], 1
    %930 = vsyncpa [#allocation12], 1
    %931 = vsyncpa [#allocation4], 1
    %s932 = scalar_lea.sflag [#allocation4], 1
    %933 = vsyncpa %s932, 1

</llo_original>
